<compile_context>
chip_gen: v5e
topology: v5e:2x2
jax: 0.10.0
libtpu: 0.0.40
codegen_flags: <defaults>
</compile_context>

<pallas_src>
import functools

import jax
import jax.numpy as jnp
from jax import lax
from jax.experimental import pallas as pl
from jax.experimental.pallas import tpu as pltpu

BN_EPS = 1e-5
_VMEM_LIMIT_BYTES = 32 * 1024 * 1024      # safe on v5e/v6e (128 MiB) and v7x (64 MiB)
_SINGLE_PASS_BUDGET = 20 * 1024 * 1024    # threshold for the fits-in-VMEM fast path


def _round_up(a, b):
    return (a + b - 1) // b * b


# ----------------------------------------------------------------------------
# Fast path: whole problem fits in VMEM -> single pass (two-pass statistics).
# ----------------------------------------------------------------------------
def _fcn_single_kernel(x_ref, w_ref, gamma_ref, beta_ref, o_ref, *, inv_n):
    # x_ref: (n, cin)  w_ref: (cin, cout)  gamma/beta: (1, cout)  o_ref: (n, cout)
    y = jnp.dot(x_ref[...], w_ref[...], preferred_element_type=jnp.float32)
    mean = jnp.sum(y, axis=0, keepdims=True) * inv_n             # (1, cout)
    d = y - mean
    var = jnp.sum(d * d, axis=0, keepdims=True) * inv_n          # (1, cout)
    scale = gamma_ref[...] * lax.rsqrt(var + BN_EPS)
    o_ref[...] = jnp.maximum(d * scale + beta_ref[...], 0.0).astype(o_ref.dtype)


# ----------------------------------------------------------------------------
# Tiled path, call 1: per-row-tile partial sum / sum-of-squares of y = x @ W.
# Grid axis is "parallel" (independent output block per tile).
# ----------------------------------------------------------------------------
def _fcn_stats_kernel(x_ref, w_ref, part_ref, *, n_rows):
    # x_ref: (tn, cin)  w_ref: (cin, cout)  part_ref: (1, 2, cout)
    i = pl.program_id(0)
    tn = x_ref.shape[0]
    row = i * tn + lax.broadcasted_iota(jnp.int32, (tn, 1), 0)
    # Mask rows past the real end (ragged last tile): zeroed rows add 0 to sums.
    x = jnp.where(row < n_rows, x_ref[...], 0.0)
    y = jnp.dot(x, w_ref[...], preferred_element_type=jnp.float32)
    s = jnp.sum(y, axis=0, keepdims=True)          # (1, cout)
    sq = jnp.sum(y * y, axis=0, keepdims=True)     # (1, cout)
    part_ref[...] = jnp.concatenate([s, sq], axis=0)[None]       # (1, 2, cout)


# ----------------------------------------------------------------------------
# Tiled path, call 2: recompute y per tile, fused scale/shift + ReLU, store.
# Rows past the real end are garbage but never written back (bounded store).
# ----------------------------------------------------------------------------
def _fcn_norm_kernel(x_ref, w_ref, scale_ref, shift_ref, o_ref):
    y = jnp.dot(x_ref[...], w_ref[...], preferred_element_type=jnp.float32)
    o_ref[...] = jnp.maximum(y * scale_ref[...] + shift_ref[...],
                             0.0).astype(o_ref.dtype)


def fcn_forward(x, weight, bias, gamma, beta, *, row_tile=4096,
                force_tiled=False):
    """x: (kk, t, cin) -> (kk, t, cout). Matches PyTorch FCN.forward (train-mode BN)."""
    del bias  # Exactly cancelled by the BatchNorm mean subtraction.

    kk, t, cin = x.shape
    cout = weight.shape[0]
    n = kk * t
    inv_n = 1.0 / n

    x2d = x.reshape(n, cin).astype(jnp.float32)          # metadata reshape (no pad)
    w_t = weight.T.astype(jnp.float32)                   # (cin, cout), one-time
    gamma2 = gamma.astype(jnp.float32).reshape(1, cout)
    beta2 = beta.astype(jnp.float32).reshape(1, cout)

    # Estimated single-pass VMEM footprint (VMEM lane-pads last dim to 128 and
    # the sublane dim to 8): x + y + out + W, all f32.
    rn, ci, co = _round_up(n, 8), _round_up(cin, 128), _round_up(cout, 128)
    single_bytes = 4 * (rn * ci + 2 * rn * co + ci * co)

    if not force_tiled and single_bytes <= _SINGLE_PASS_BUDGET:
        out2d = pl.pallas_call(
            functools.partial(_fcn_single_kernel, inv_n=inv_n),
            out_shape=jax.ShapeDtypeStruct((n, cout), jnp.float32),
            compiler_params=pltpu.CompilerParams(
                vmem_limit_bytes=_VMEM_LIMIT_BYTES),
        )(x2d, w_t, gamma2, beta2)
        return out2d.reshape(kk, t, cout)

    # ---------------------------- tiled path --------------------------------
    tn = min(_round_up(row_tile, 8), _round_up(n, 8))
    num_tiles = pl.cdiv(n, tn)

    parts = pl.pallas_call(
        functools.partial(_fcn_stats_kernel, n_rows=n),
        out_shape=jax.ShapeDtypeStruct((num_tiles, 2, cout), jnp.float32),
        grid=(num_tiles,),
        in_specs=[
            pl.BlockSpec((tn, cin), lambda i: (i, 0)),       # x row tile
            pl.BlockSpec((cin, cout), lambda i: (0, 0)),     # weight, VMEM-resident
        ],
        out_specs=pl.BlockSpec((1, 2, cout), lambda i: (i, 0, 0)),
        compiler_params=pltpu.CompilerParams(
            dimension_semantics=("parallel",),
            vmem_limit_bytes=_VMEM_LIMIT_BYTES),
    )(x2d, w_t)

    # Tiny (2, cout) reduction + BN scale/shift folding in plain XLA.
    tot = jnp.sum(parts, axis=0)                             # (2, cout)
    mean = tot[0:1] * inv_n                                  # (1, cout)
    var = jnp.maximum(tot[1:2] * inv_n - mean * mean, 0.0)   # (1, cout)
    scale = gamma2 * lax.rsqrt(var + BN_EPS)
    shift = beta2 - mean * scale

    out2d = pl.pallas_call(
        _fcn_norm_kernel,
        out_shape=jax.ShapeDtypeStruct((n, cout), jnp.float32),
        grid=(num_tiles,),
        in_specs=[
            pl.BlockSpec((tn, cin), lambda i: (i, 0)),       # x row tile
            pl.BlockSpec((cin, cout), lambda i: (0, 0)),     # weight
            pl.BlockSpec((1, cout), lambda i: (0, 0)),       # folded scale
            pl.BlockSpec((1, cout), lambda i: (0, 0)),       # folded shift
        ],
        out_specs=pl.BlockSpec((tn, cout), lambda i: (i, 0)),
        compiler_params=pltpu.CompilerParams(
            dimension_semantics=("parallel",),
            vmem_limit_bytes=_VMEM_LIMIT_BYTES),
    )(x2d, w_t, scale, shift)

    return out2d.reshape(kk, t, cout)


def init_fcn_params(key, cin, cout):
    """Deterministic parameter init (PyTorch nn.Linear-style uniform bounds)."""
    kw, kb = jax.random.split(key)
    bound = 1.0 / jnp.sqrt(cin)
    weight = jax.random.uniform(kw, (cout, cin), jnp.float32, -bound, bound)
    bias = jax.random.uniform(kb, (cout,), jnp.float32, -bound, bound)
    gamma = jnp.ones((cout,), jnp.float32)    # BatchNorm1d default weight
    beta = jnp.zeros((cout,), jnp.float32)    # BatchNorm1d default bias
    return weight, bias, gamma, beta


def fcn_reference(x, weight, bias, gamma, beta):
    """Plain-JAX reference mirroring PyTorch semantics (training-mode BN)."""
    kk, t, cin = x.shape
    y = x.reshape(kk * t, cin) @ weight.T + bias
    mean = jnp.mean(y, axis=0, keepdims=True)
    var = jnp.mean((y - mean) ** 2, axis=0, keepdims=True)
    y_hat = (y - mean) / jnp.sqrt(var + BN_EPS)
    out = jnp.maximum(y_hat * gamma + beta, 0.0)
    return out.reshape(kk, t, -1)


def _check(kk, t, cin, cout, seed, **kwargs):
    key = jax.random.PRNGKey(seed)
    kx, kp = jax.random.split(key)
    x = jax.random.normal(kx, (kk, t, cin), dtype=jnp.float32)
    weight, bias, gamma, beta = init_fcn_params(kp, cin, cout)

    out = fcn_forward(x, weight, bias, gamma, beta, **kwargs)
    out = jax.block_until_ready(out)

    ref = fcn_reference(x, weight, bias, gamma, beta)
    assert out.shape == (kk, t, cout), out.shape
    err = float(jnp.max(jnp.abs(out - ref)))
    assert jnp.allclose(out, ref, atol=1e-4, rtol=1e-4), err


if __name__ == "__main__":
    # Fits-in-VMEM single-pass path: N=16 rows, cin=cout=32.
    _check(kk=2, t=8, cin=32, cout=32, seed=0)
    # Tiled two-call path: N = 37*29 = 1073 rows over row tiles of 256
    # (ragged last tile of 49 rows), narrow cout=24 (true-width output).
    _check(kk=37, t=29, cin=16, cout=24, seed=1, row_tile=256, force_tiled=True)

    print("KERNEL_OK")
</pallas_src>

<mosaic_0001>
module attributes {stable_mosaic.version = 11 : i64} {
  func.func @_fcn_single_kernel(%arg0: memref<16x32xf32, #tpu.memory_space<vmem>>, %arg1: memref<32x32xf32, #tpu.memory_space<vmem>>, %arg2: memref<1x32xf32, #tpu.memory_space<vmem>>, %arg3: memref<1x32xf32, #tpu.memory_space<vmem>>, %arg4: memref<16x32xf32, #tpu.memory_space<vmem>>) attributes {dimension_semantics = [], scalar_prefetch = 0 : i64, scratch_operands = 0 : i64, tpu.core_type = #tpu.core_type<tc>} {
    %c0 = arith.constant 0 : index
    %c0_0 = arith.constant 0 : index
    %0 = vector.load %arg0[%c0, %c0_0] : memref<16x32xf32, #tpu.memory_space<vmem>>, vector<16x32xf32>
    %c0_1 = arith.constant 0 : index
    %c0_2 = arith.constant 0 : index
    %1 = vector.load %arg1[%c0_1, %c0_2] : memref<32x32xf32, #tpu.memory_space<vmem>>, vector<32x32xf32>
    %cst = arith.constant dense<0.000000e+00> : vector<16x32xf32>
    %2 = tpu.matmul %0, %1, %cst {dimension_numbers = #tpu.dot_dimension_numbers<[1], [0], [0], [1], [0, 0, 1, 1], [], []>} : vector<16x32xf32>, vector<32x32xf32>, vector<16x32xf32> -> vector<16x32xf32>
    %cst_3 = arith.constant dense<0.000000e+00> : vector<32xf32>
    %3 = vector.multi_reduction <add>, %2, %cst_3 [0] : vector<16x32xf32> to vector<32xf32>
    %4 = vector.shape_cast %3 : vector<32xf32> to vector<1x32xf32>
    %cst_4 = arith.constant 6.250000e-02 : f32
    %5 = vector.broadcast %cst_4 : f32 to vector<1x32xf32>
    %6 = arith.mulf %4, %5 : vector<1x32xf32>
    %7 = vector.broadcast %6 : vector<1x32xf32> to vector<16x32xf32>
    %8 = arith.subf %2, %7 : vector<16x32xf32>
    %9 = arith.mulf %8, %8 : vector<16x32xf32>
    %cst_5 = arith.constant dense<0.000000e+00> : vector<32xf32>
    %10 = vector.multi_reduction <add>, %9, %cst_5 [0] : vector<16x32xf32> to vector<32xf32>
    %11 = vector.shape_cast %10 : vector<32xf32> to vector<1x32xf32>
    %cst_6 = arith.constant 6.250000e-02 : f32
    %12 = vector.broadcast %cst_6 : f32 to vector<1x32xf32>
    %13 = arith.mulf %11, %12 : vector<1x32xf32>
    %c0_7 = arith.constant 0 : index
    %c0_8 = arith.constant 0 : index
    %14 = vector.load %arg2[%c0_7, %c0_8] : memref<1x32xf32, #tpu.memory_space<vmem>>, vector<1x32xf32>
    %cst_9 = arith.constant 9.99999974E-6 : f32
    %15 = vector.broadcast %cst_9 : f32 to vector<1x32xf32>
    %16 = arith.addf %13, %15 : vector<1x32xf32>
    %17 = math.rsqrt %16 : vector<1x32xf32>
    %18 = arith.mulf %14, %17 : vector<1x32xf32>
    %19 = vector.broadcast %18 : vector<1x32xf32> to vector<16x32xf32>
    %20 = arith.mulf %8, %19 : vector<16x32xf32>
    %c0_10 = arith.constant 0 : index
    %c0_11 = arith.constant 0 : index
    %21 = vector.load %arg3[%c0_10, %c0_11] : memref<1x32xf32, #tpu.memory_space<vmem>>, vector<1x32xf32>
    %22 = vector.broadcast %21 : vector<1x32xf32> to vector<16x32xf32>
    %23 = arith.addf %20, %22 : vector<16x32xf32>
    %cst_12 = arith.constant 0.000000e+00 : f32
    %24 = vector.broadcast %cst_12 : f32 to vector<16x32xf32>
    %25 = arith.maximumf %23, %24 : vector<16x32xf32>
    %c0_13 = arith.constant 0 : index
    %c0_14 = arith.constant 0 : index
    %26 = vector.load %arg4[%c0_13, %c0_14] : memref<16x32xf32, #tpu.memory_space<vmem>>, vector<16x32xf32>
    tpu.vector_store %arg4[%c0_13, %c0_14], %25 {strides = array<i32>} : memref<16x32xf32, #tpu.memory_space<vmem>>, vector<16x32xf32>,
    return
  }
}

</mosaic_0001>

<llo_original>
// kernel: tpu_custom_call.1
$region0: #{tpu_custom_call.1}
  #allocation0 [shape = 'u32[]', space=smem, size = 0x4, offset = 0x4, fixed_abs, tag = 'smem constant byte address 0x4 - core index']
  #allocation1 [shape = 'u32[72,128]{1,0:T(1,128)}', space=vmem, size = 0x9000, scoped, tag = 'internal scratch']
  %s0 = inlined_call_operand.hbm [shape: f32[16,32], index: 0, kind: input, shape index: {}]
  %s1 = inlined_call_operand.hbm [shape: f32[32,32], index: 1, kind: input, shape index: {}]
  %s2 = inlined_call_operand.vmem [shape: f32[1,32], index: 2, kind: input, shape index: {}]
  %s3 = inlined_call_operand.vmem [shape: f32[1,32], index: 3, kind: input, shape index: {}]
  %s4 = inlined_call_operand.hbm [shape: f32[16,32], index: 4, kind: output, shape index: {}]
  %s5 = sld [smem:[#allocation0]]
  $region34: #{tpu_custom_call.1} parent=0
    _
  %s7 = ssub.s32 1, %s5
  %s8 = scalar_select 0, %s7, %s5
  $region1: #{tpu_custom_call.1} parent=0
    #allocation2 [shape = 'u8[8192]{0}', space=vmem, size = 0x2000, scoped, tag = 'input window, operand 0, single buffered']
    #allocation3 [shape = 's32[1]{0}', space=sflag, size = 0x4, scoped, tag = 'scoped memory for tpu_custom_call.1']
    #allocation4 [shape = 's32[1]{0}', space=sflag, size = 0x4, scoped, tag = 'scoped memory for tpu_custom_call.1']
    #allocation5 [shape = 'u8[16384]{0}', space=vmem, size = 0x4000, scoped, tag = 'input window, operand 1, single buffered']
    #allocation6 [shape = 's32[1]{0}', space=sflag, size = 0x4, scoped, tag = 'scoped memory for tpu_custom_call.1']
    #allocation7 [shape = 'u8[8192]{0}', space=vmem, size = 0x2000, scoped, tag = 'output window, operand 0, single buffered']
    %9 = vsyncpa [#allocation3], 0
    %10 = vsyncpa [#allocation6], 0
    %11 = vsyncpa [#allocation4], 0
    // Predicated region
    $region2: #{tpu_custom_call.1} parent=1 // pred_check
      _
    $region3: #{tpu_custom_call.1} parent=1 // pred_check_branch
      %13 = sbr.rel (0) target = $region5
    $region4: #{tpu_custom_call.1} parent=1 // pred_region
      %15 = vsyncadd [#allocation3], 0
      %s16 = sshll.u32 %s0, 4
      %s17 = int_to_ptr.hbm [resolvable:$true] %s16
      %s18 = sshll.u32 [#allocation2], 4
      %s19 = int_to_ptr.vmem [resolvable:$true] %s18
      %24 = dma.hbm_to_vmem [thread:$0]  %s17, 256, %s19, [#allocation3], 128, 128, 8
    $region5: #{tpu_custom_call.1} parent=1 // pred_fallthru
      _
    // Predicated region
    $region6: #{tpu_custom_call.1} parent=1 // pred_check
      _
    $region7: #{tpu_custom_call.1} parent=1 // pred_check_branch
      %26 = sbr.rel (0) target = $region9
    $region8: #{tpu_custom_call.1} parent=1 // pred_region
      %28 = vsyncadd [#allocation6], 0
      %s29 = sshll.u32 %s1, 4
      %s30 = int_to_ptr.hbm [resolvable:$true] %s29
      %s31 = sshll.u32 [#allocation5], 4
      %s32 = int_to_ptr.vmem [resolvable:$true] %s31
      %37 = dma.hbm_to_vmem [thread:$0]  %s30, 512, %s32, [#allocation6], 128, 128, 8
    $region9: #{tpu_custom_call.1} parent=1 // pred_fallthru
      _
    // Predicated region
    $region10: #{tpu_custom_call.1} parent=1 // pred_check
      _
    $region11: #{tpu_custom_call.1} parent=1 // pred_check_branch
      %39 = sbr.rel (0) target = $region13
    $region12: #{tpu_custom_call.1} parent=1 // pred_region
      _
    $region13: #{tpu_custom_call.1} parent=1 // pred_fallthru
      _
    // Predicated region
    $region14: #{tpu_custom_call.1} parent=1 // pred_check
      _
    $region15: #{tpu_custom_call.1} parent=1 // pred_check_branch
      %41 = sbr.rel (0) target = $region17
    $region16: #{tpu_custom_call.1} parent=1 // pred_region
      _
    $region17: #{tpu_custom_call.1} parent=1 // pred_fallthru
      _
    // Predicated region
    $region18: #{tpu_custom_call.1} parent=1 // pred_check
      _
    $region19: #{tpu_custom_call.1} parent=1 // pred_check_branch
      %43 = sbr.rel (0) target = $region21
    $region20: #{tpu_custom_call.1} parent=1 // pred_region
      %45 = dma.done [#allocation3], 256
    $region21: #{tpu_custom_call.1} parent=1 // pred_fallthru
      _
    // Predicated region
    $region22: #{tpu_custom_call.1} parent=1 // pred_check
      _
    $region23: #{tpu_custom_call.1} parent=1 // pred_check_branch
      %47 = sbr.rel (0) target = $region25
    $region24: #{tpu_custom_call.1} parent=1 // pred_region
      %49 = dma.done [#allocation6], 512
    $region25: #{tpu_custom_call.1} parent=1 // pred_fallthru
      _
    %v50 = vld [vmem:[#allocation2] sm:$0xff]
    %v51 = vld [vmem:[#allocation2 + $0x8] sm:$0xff]
    %v52 = vld [vmem:[#allocation5] sm:$0xff]
    %v53 = vld [vmem:[#allocation5 + $0x8] sm:$0xff]
    %v54 = vld [vmem:[#allocation5 + $0x10] sm:$0xff]
    %v55 = vld [vmem:[#allocation5 + $0x18] sm:$0xff]
    %vm56 = vcmask 261120
    %v58 = vsel %vm56, %v50, 0
    %v61 = vsel %vm56, %v51, 0
    %63 = vmatpush.msra.mxu0 0.0
    %64 = vmatpush.msra.mxu0 0.0
    %65 = vmatpush.msra.mxu0 0.0
    %66 = vmatpush.msra.mxu0 0.0
    %67 = vmatpush.msra.mxu0 0.0
    %68 = vmatpush.msra.mxu0 0.0
    %69 = vmatpush.msra.mxu0 0.0
    %70 = vmatpush.msra.mxu0 0.0
    %71 = vmatpush.msra.mxu0 0.0
    %72 = vmatpush.msra.mxu0 0.0
    %73 = vmatpush.msra.mxu0 0.0
    %74 = vmatpush.msra.mxu0 0.0
    %75 = vmatpush.msra.mxu0 %v55
    %76 = vmatpush.msra.mxu0 %v54
    %77 = vmatpush.msra.mxu0 %v53
    %78 = vmatpush.msra.mxu0 %v52
    %79 = vmatmul.f32.gmra.mxu0 %v58
    %v80 = vpop.f32.mrf.mxu0
    %v81 = vadd.f32 0.0, %v80
    %82 = vmatmul.f32.gmra.mxu0 %v61
    %v83 = vpop.f32.mrf.mxu0
    %v84 = vadd.f32 0.0, %v83
    %85 = vdwg.mxu0
    %v86 = vsel %vm56, %v81, 0.0
    %v87 = vsel %vm56, %v84, 0.0
    %v88 = vadd.f32 %v86, %v87
    %v89 = vrot.slane %v88, 4
    %v90 = vadd.f32 %v88, %v89
    %v91 = vrot.slane %v90, 2
    %v92 = vadd.f32 %v90, %v91
    %v93 = vrot.slane %v92, 1
    %v94 = vadd.f32 %v92, %v93
    %v95 = vmul.f32 %v94, 0.0625
    %v96 = vsub.f32 %v81, %v95
    %v97 = vsub.f32 %v84, %v95
    %v98 = vmul.f32 %v96, %v96
    %v99 = vmul.f32 %v97, %v97
    %v100 = vsel %vm56, %v98, 0.0
    %v101 = vsel %vm56, %v99, 0.0
    %v102 = vadd.f32 %v100, %v101
    %v103 = vrot.slane %v102, 4
    %v104 = vadd.f32 %v102, %v103
    %v105 = vrot.slane %v104, 2
    %v106 = vadd.f32 %v104, %v105
    %v107 = vrot.slane %v106, 1
    %v108 = vadd.f32 %v106, %v107
    %v109 = vmul.f32 %v108, 0.0625
    %v110 = vld [vmem:[%s2] sm:$0x1]
    %v111 = vadd.f32 %v109, 1e-05
    %v112 = vrsqrt.pop %v111
    %v113 = vmul.f32 %v112, %v111
    %v114 = vmul.f32 %v113, %v112
    %v115 = vmul.f32 0.5, %v114
    %v116 = vsub.f32 1.5, %v115
    %v117 = vmul.f32 %v112, %v116
    %vm118 = vweird.f32 %v111
    %vm119 = vweird.f32 %v112
    %vm120 = vmor %vm118, %vm119
    %v121 = vsel %vm120, %v112, %v117
    %v122 = vmul.f32 %v110, %v121
    %v124 = vperm.slane %v122, 0
    %v126 = vmul.f32 %v96, %v124
    %v127 = vmul.f32 %v97, %v124
    %v128 = vld [vmem:[%s3] sm:$0x1]
    %v130 = vperm.slane %v128, 0
    %v132 = vadd.f32 %v126, %v130
    %v133 = vadd.f32 %v127, %v130
    %v134 = vmax.f32 %v132, 0.0
    %v135 = vmax.f32 %v133, 0.0
    %136 = vst.msk [vmem:[#allocation7] sm:$0xff] %vm56, %v134
    %137 = vst.msk [vmem:[#allocation7 + $0x8] sm:$0xff] %vm56, %v135
    // Predicated region
    $region26: #{tpu_custom_call.1} parent=1 // pred_check
      _
    $region27: #{tpu_custom_call.1} parent=1 // pred_check_branch
      %139 = sbr.rel (0) target = $region29
    $region28: #{tpu_custom_call.1} parent=1 // pred_region
      %141 = vsyncadd [#allocation4], 0
      %s142 = sshll.u32 [#allocation7], 4
      %s143 = int_to_ptr.vmem [resolvable:$true] %s142
      %s144 = sshll.u32 %s4, 4
      %s145 = int_to_ptr.hbm [resolvable:$true] %s144
      %150 = dma.vmem_to_hbm [thread:$0]  %s143, 256, %s145, [#allocation4], 128, 128, 8
    $region29: #{tpu_custom_call.1} parent=1 // pred_fallthru
      _
    // Predicated region
    $region30: #{tpu_custom_call.1} parent=1 // pred_check
      _
    $region31: #{tpu_custom_call.1} parent=1 // pred_check_branch
      %152 = sbr.rel (0) target = $region33
    $region32: #{tpu_custom_call.1} parent=1 // pred_region
      %154 = dma.done [#allocation4], 256
    $region33: #{tpu_custom_call.1} parent=1 // pred_fallthru
      _
    %155 = vsyncpa [#allocation3], 1
    %156 = vsyncpa [#allocation6], 1
    %157 = vsyncpa [#allocation4], 1

</llo_original>
